<compile_context>
chip_gen: v6e
topology: v6e:2x2x1
jax: 0.10.0
libtpu: 0.0.40
codegen_flags: <defaults>
</compile_context>

<pallas_src>
import numpy as np
import jax
import jax.numpy as jnp
from jax.experimental import pallas as pl
from jax.experimental.pallas import tpu as pltpu


def _flatten_copy_kernel(x_ref, o_ref):
    # Straight lane/sublane-dense VMEM tile copy (vld/vst fully hidden under
    # the block DMAs once the grid is >= 2 steps).
    o_ref[...] = x_ref[...]


def _round_up(n, m):
    return ((n + m - 1) // m) * m


def _pick_lanes(n):
    """Largest multiple-of-128 lane width (<=1024) that divides n, else 512."""
    for cand in (1024, 896, 768, 640, 512, 384, 256, 128):
        if n % cand == 0:
            return cand, False
    return 512, True  # ragged: needs a tiny (< LANES elems) tail pad


def flatten(x, *, use_pallas_copy=False):
    """Pallas equivalent of torch Flatten: (B, ...) -> (B, prod(...)).

    Default path is the free metadata reshape (recommended).  Set
    `use_pallas_copy=True` to run the explicit Pallas tiled-copy kernel.
    """
    B = x.shape[0]
    D = int(np.prod(x.shape[1:])) if x.ndim > 1 else 1
    N = B * D

    if not use_pallas_copy or N == 0:
        # Zero-copy: flatten is pure metadata, nothing can beat not copying.
        return jnp.reshape(x, (B, D))

    itemsize = jnp.dtype(x.dtype).itemsize
    sub = max(8, 32 // itemsize)           # sublane multiple: 8 f32, 16 bf16, 32 i8
    TARGET_BLOCK_BYTES = 4 * 1024 * 1024   # ~4 MiB blocks fit every generation

    # ---- lane/sublane-dense slab layout (no whole-block padding) -------------
    LANES, ragged = _pick_lanes(N)
    rows_total = pl.cdiv(N, LANES)
    n_pad = rows_total * LANES             # == N unless truly ragged

    flat = jnp.reshape(x, (N,))
    if ragged:
        # Ragged tail only: pad < LANES elements (< 2 KiB f32), not a whole block.
        flat = jnp.pad(flat, (0, n_pad - N))
    slab = jnp.reshape(flat, (rows_total, LANES))

    # ---- block (row) sizing ---------------------------------------------------
    slab_bytes = rows_total * LANES * itemsize
    if slab_bytes <= (1 << 20):
        # Tiny input: one full-extent block (legal even if rows_total % 8 != 0,
        # since the block equals the array dims). Pipelining buys nothing here.
        rows_per_block = rows_total
    else:
        target_rows = max(sub, (TARGET_BLOCK_BYTES // (LANES * itemsize)) // sub * sub)
        max_rows = max(sub, (rows_total // sub) * sub)     # largest sub-multiple <= rows
        # Guarantee >= 2 grid steps: keeps the DMA pipeline >= 2 deep and lets
        # v7x shard the grid across its two TensorCores.
        half_rows = max(sub, _round_up(pl.cdiv(rows_total, 2), sub))
        rows_per_block = min(target_rows, max_rows, half_rows)

    num_blocks = pl.cdiv(rows_total, rows_per_block)  # last block masked if partial

    out_slab = pl.pallas_call(
        _flatten_copy_kernel,
        out_shape=jax.ShapeDtypeStruct((rows_total, LANES), x.dtype),
        grid=(num_blocks,),
        in_specs=[pl.BlockSpec((rows_per_block, LANES), lambda i: (i, 0))],
        out_specs=pl.BlockSpec((rows_per_block, LANES), lambda i: (i, 0)),
        compiler_params=pltpu.CompilerParams(
            dimension_semantics=("parallel",),
            vmem_limit_bytes=32 * 1024 * 1024,
        ),
        cost_estimate=pl.CostEstimate(
            flops=0, transcendentals=0, bytes_accessed=2 * n_pad * itemsize),
    )(slab)

    out_flat = jnp.reshape(out_slab, (n_pad,))
    if ragged:
        out_flat = out_flat[:N]
    return jnp.reshape(out_flat, (B, D))
    # TODO(synk): for an even leaner copy path, an HBM->HBM chunked
    # pltpu.make_async_copy variant (memory_space=pl.ANY) would skip VMEM
    # staging entirely; the VMEM-staged copy above already hides under DMA.


if __name__ == "__main__":
    key = jax.random.PRNGKey(0)

    # Shape consistent with a conv-encoder feature map: NCHW = (2, 4, 16, 16)
    x = jax.random.normal(key, (2, 4, 16, 16), dtype=jnp.float32)
    ref = jnp.reshape(x, (x.shape[0], -1))

    out_default = jax.block_until_ready(flatten(x))                       # zero-copy
    out_kernel = jax.block_until_ready(flatten(x, use_pallas_copy=True))  # Pallas copy

    assert out_default.shape == (2, 4 * 16 * 16), out_default.shape
    assert out_kernel.shape == (2, 4 * 16 * 16), out_kernel.shape
    assert out_kernel.dtype == x.dtype
    assert bool(jnp.array_equal(out_default, ref)), "mismatch (zero-copy path)"
    assert bool(jnp.array_equal(out_kernel, ref)), "mismatch (pallas copy path)"

    # Ragged case: N not a multiple of 128 exercises the tiny-tail-pad path.
    x2 = jax.random.normal(jax.random.PRNGKey(0), (2, 3, 5, 7), dtype=jnp.float32)
    ref2 = jnp.reshape(x2, (x2.shape[0], -1))
    out2 = jax.block_until_ready(flatten(x2, use_pallas_copy=True))
    assert out2.shape == (2, 3 * 5 * 7), out2.shape
    assert bool(jnp.array_equal(out2, ref2)), "mismatch (ragged pallas path)"

    print("KERNEL_OK")
</pallas_src>

<mosaic_0001>
module attributes {stable_mosaic.version = 11 : i64} {
  func.func @_flatten_copy_kernel(%arg0: i32, %arg1: memref<2x1024xf32, #tpu.memory_space<vmem>>, %arg2: memref<2x1024xf32, #tpu.memory_space<vmem>>) attributes {dimension_semantics = [#tpu.dimension_semantics<parallel>], iteration_bounds = array<i64: 1>, scalar_prefetch = 0 : i64, scratch_operands = 0 : i64, tpu.core_type = #tpu.core_type<tc>, window_params = [{transform_indices = @transform_0, window_bounds = array<i64: 2, 1024>}, {transform_indices = @transform_1, window_bounds = array<i64: 2, 1024>}]} {
    %c0 = arith.constant 0 : index
    %c0_0 = arith.constant 0 : index
    %0 = vector.load %arg1[%c0, %c0_0] : memref<2x1024xf32, #tpu.memory_space<vmem>>, vector<2x1024xf32>
    %c0_1 = arith.constant 0 : index
    %c0_2 = arith.constant 0 : index
    %1 = vector.load %arg2[%c0_1, %c0_2] : memref<2x1024xf32, #tpu.memory_space<vmem>>, vector<2x1024xf32>
    tpu.vector_store %arg2[%c0_1, %c0_2], %0 {strides = array<i32>} : memref<2x1024xf32, #tpu.memory_space<vmem>>, vector<2x1024xf32>,
    return
  }
  func.func @transform_0(%arg0: i32) -> (i32, i32) {
    %c0_i32 = arith.constant 0 : i32
    %c0_i32_0 = arith.constant 0 : i32
    return %arg0, %c0_i32 : i32, i32
  }
  func.func @transform_1(%arg0: i32) -> (i32, i32) {
    %c0_i32 = arith.constant 0 : i32
    %c0_i32_0 = arith.constant 0 : i32
    return %arg0, %c0_i32 : i32, i32
  }
}

</mosaic_0001>

<llo_original>
// kernel: tpu_custom_call.1
$region0: #{tpu_custom_call.1}
  #allocation0 [shape = 'u32[]', space=smem, size = 0x4, offset = 0x4, fixed_abs, tag = 'smem constant byte address 0x4 - core index']
  #allocation1 [shape = 'u32[144,128]{1,0:T(1,128)}', space=vmem, size = 0x12000, scoped, tag = 'internal scratch']
  %s0 = inlined_call_operand.hbm [shape: f32[2,1024], index: 0, kind: input, shape index: {}]
  %s1 = inlined_call_operand.hbm [shape: f32[2,1024], index: 1, kind: output, shape index: {}]
  %s2 = sld [smem:[#allocation0]]
  $region18: #{tpu_custom_call.1} parent=0
    _
  %s4 = ssub.s32 1, %s2
  %s5 = scalar_select 0, %s4, %s2
  $region1: #{tpu_custom_call.1} parent=0
    #allocation2 [shape = 'u8[8192]{0}', space=vmem, size = 0x2000, scoped, tag = 'input window, operand 0, single buffered']
    #allocation3 [shape = 's32[1]{0}', space=sflag, size = 0x4, scoped, tag = 'scoped memory for tpu_custom_call.1']
    #allocation4 [shape = 's32[1]{0}', space=sflag, size = 0x4, scoped, tag = 'scoped memory for tpu_custom_call.1']
    #allocation5 [shape = 'u8[8192]{0}', space=vmem, size = 0x2000, scoped, tag = 'output window, operand 0, single buffered']
    %6 = vsyncpa [#allocation3], 0
    %7 = vsyncpa [#allocation4], 0
    // Predicated region
    $region2: #{tpu_custom_call.1} parent=1 // pred_check
      _
    $region3: #{tpu_custom_call.1} parent=1 // pred_check_branch
      %9 = sbr.rel (0) target = $region5
    $region4: #{tpu_custom_call.1} parent=1 // pred_region
      %s11 = ssub.s32 256, 256
      %12 = vsyncadd [#allocation3], %s11
      %s14 = sshll.u32 [#allocation2], 4
      %s15 = int_to_ptr.vmem [resolvable:$true] %s14
      %17 = dma.hbm_to_vmem [thread:$0]  %s0, 256, %s15, [#allocation3]
    $region5: #{tpu_custom_call.1} parent=1 // pred_fallthru
      _
    // Predicated region
    $region6: #{tpu_custom_call.1} parent=1 // pred_check
      _
    $region7: #{tpu_custom_call.1} parent=1 // pred_check_branch
      %19 = sbr.rel (0) target = $region9
    $region8: #{tpu_custom_call.1} parent=1 // pred_region
      %20 = dma.done [#allocation3], 256
    $region9: #{tpu_custom_call.1} parent=1 // pred_fallthru
      _
    %v21 = vld [vmem:[#allocation2] sm:$0xff]
    %v22 = vld [vmem:[#allocation2 + $0x8] sm:$0xff]
    %23 = vst [vmem:[#allocation5] sm:$0xff] %v21
    %24 = vst [vmem:[#allocation5 + $0x8] sm:$0xff] %v22
    // Predicated region
    $region10: #{tpu_custom_call.1} parent=1 // pred_check
      _
    $region11: #{tpu_custom_call.1} parent=1 // pred_check_branch
      %26 = sbr.rel (0) target = $region13
    $region12: #{tpu_custom_call.1} parent=1 // pred_region
      %s28 = ssub.s32 256, 256
      %29 = vsyncadd [#allocation4], %s28
      %s31 = sshll.u32 [#allocation5], 4
      %s32 = int_to_ptr.vmem [resolvable:$true] %s31
      %34 = dma.vmem_to_hbm [thread:$0]  %s32, 256, %s1, [#allocation4]
    $region13: #{tpu_custom_call.1} parent=1 // pred_fallthru
      _
    // Predicated region
    $region14: #{tpu_custom_call.1} parent=1 // pred_check
      _
    $region15: #{tpu_custom_call.1} parent=1 // pred_check_branch
      %36 = sbr.rel (0) target = $region17
    $region16: #{tpu_custom_call.1} parent=1 // pred_region
      %37 = dma.done [#allocation4], 256
    $region17: #{tpu_custom_call.1} parent=1 // pred_fallthru
      _
    %38 = vsyncpa [#allocation3], 1
    %39 = vsyncpa [#allocation4], 1

</llo_original>
